<compile_context>
chip_gen: v7x
topology: tpu7x:2x2x1
jax: 0.10.0
libtpu: 0.0.40
codegen_flags: <defaults>
</compile_context>

<pallas_src>
import jax
import jax.numpy as jnp
from jax.experimental import pallas as pl
from jax.experimental.pallas import tpu as pltpu


def _diffblock_kernel(x_ref, w_ref, b_ref, o_ref):
    """One (tm, C_in) row tile: relu(x @ W_t + b) on the MXU."""
    x = x_ref[...]                       # (tm, C_in)
    w = w_ref[...]                       # (C_in, C_out)  (already transposed)
    b = b_ref[...]                       # (1, C_out)
    y = jnp.dot(x, w, preferred_element_type=jnp.float32) + b
    o_ref[...] = jnp.maximum(y, 0.0).astype(o_ref.dtype)


def _round_up(n, m):
    return ((n + m - 1) // m) * m


def diff_block_forward(x, weight, bias, *, max_tile=512):
    """DiffBlock forward (inference mode; dropout is identity).

    x:      (B, T, C_in)  float32
    weight: (C_out, C_in, 1) or (C_out, C_in)  -- Conv1d kernel_size=1 weights
    bias:   (C_out,)
    returns (B, T, C_out)
    """
    B, T, C_in = x.shape
    w2d = weight.reshape(weight.shape[0], weight.shape[1])      # (C_out, C_in)
    C_out = w2d.shape[0]

    # Flatten batch*time into one row axis; pad rows so every tile is full.
    M = B * T
    tm = min(max_tile, _round_up(M, 8))        # row tile, multiple of 8
    M_pad = _round_up(M, tm)

    x2 = x.reshape(M, C_in)
    if M_pad != M:
        x2 = jnp.pad(x2, ((0, M_pad - M), (0, 0)))
    w_t = jnp.transpose(w2d)                                    # (C_in, C_out)
    b2 = bias.reshape(1, C_out)

    grid = (M_pad // tm,)

    grid_spec = pltpu.PrefetchScalarGridSpec(
        num_scalar_prefetch=0,
        grid=grid,
        in_specs=[
            pl.BlockSpec((tm, C_in), lambda i: (i, 0)),
            pl.BlockSpec((C_in, C_out), lambda i: (0, 0)),
            pl.BlockSpec((1, C_out), lambda i: (0, 0)),
        ],
        out_specs=pl.BlockSpec((tm, C_out), lambda i: (i, 0)),
    )

    out = pl.pallas_call(
        _diffblock_kernel,
        out_shape=jax.ShapeDtypeStruct((M_pad, C_out), x.dtype),
        grid_spec=grid_spec,
        compiler_params=pltpu.CompilerParams(
            dimension_semantics=("parallel",)),
    )(x2, w_t, b2)

    return out[:M].reshape(B, T, C_out)


def reference_jax(x, weight, bias):
    """Plain-JAX literal translation of the PyTorch forward (eval mode)."""
    w2d = weight.reshape(weight.shape[0], weight.shape[1])      # (C_out, C_in)
    y = jnp.einsum("btc,oc->bto", x, w2d) + bias[None, None, :]
    return jnp.maximum(y, 0.0)


if __name__ == "__main__":
    # Small deterministic shapes consistent with the module:
    #   batch=2, seq(time)=16, channels=128 (lane-dense channel axis).
    B, T, C = 2, 16, 128
    dropout_p = 0.1  # inactive at inference

    k0, k1, k2 = jax.random.split(jax.random.PRNGKey(0), 3)
    x = jax.random.normal(k0, (B, T, C), jnp.float32)
    # Conv1d(kernel_size=1) weight layout: (out_channels, in_channels, 1)
    weight = jax.random.normal(k1, (C, C, 1), jnp.float32) * (1.0 / jnp.sqrt(C))
    bias = jax.random.normal(k2, (C,), jnp.float32) * 0.1

    out = diff_block_forward(x, weight, bias)
    out = jax.block_until_ready(out)

    ref = reference_jax(x, weight, bias)
    assert out.shape == (B, T, C), out.shape
    assert jnp.allclose(out, ref, rtol=1e-5, atol=1e-4), float(
        jnp.max(jnp.abs(out - ref)))
    print("KERNEL_OK")
</pallas_src>

<mosaic_0001>
module attributes {stable_mosaic.version = 11 : i64} {
  func.func @_diffblock_kernel(%arg0: i32, %arg1: memref<32x128xf32, #tpu.memory_space<vmem>>, %arg2: memref<128x128xf32, #tpu.memory_space<vmem>>, %arg3: memref<1x128xf32, #tpu.memory_space<vmem>>, %arg4: memref<32x128xf32, #tpu.memory_space<vmem>>) attributes {dimension_semantics = [#tpu.dimension_semantics<parallel>], iteration_bounds = array<i64: 1>, scalar_prefetch = 0 : i64, scratch_operands = 0 : i64, tpu.core_type = #tpu.core_type<tc>, window_params = [{transform_indices = @transform_0, window_bounds = array<i64: 32, 128>}, {pipeline_mode = #tpu.pipeline_mode<synchronous>, transform_indices = @transform_1, window_bounds = array<i64: 128, 128>}, {pipeline_mode = #tpu.pipeline_mode<synchronous>, transform_indices = @transform_2, window_bounds = array<i64: 1, 128>}, {transform_indices = @transform_3, window_bounds = array<i64: 32, 128>}]} {
    %c0 = arith.constant 0 : index
    %c0_0 = arith.constant 0 : index
    %0 = vector.load %arg1[%c0, %c0_0] : memref<32x128xf32, #tpu.memory_space<vmem>>, vector<32x128xf32>
    %c0_1 = arith.constant 0 : index
    %c0_2 = arith.constant 0 : index
    %1 = vector.load %arg2[%c0_1, %c0_2] : memref<128x128xf32, #tpu.memory_space<vmem>>, vector<128x128xf32>
    %c0_3 = arith.constant 0 : index
    %c0_4 = arith.constant 0 : index
    %2 = vector.load %arg3[%c0_3, %c0_4] : memref<1x128xf32, #tpu.memory_space<vmem>>, vector<1x128xf32>
    %cst = arith.constant dense<0.000000e+00> : vector<32x128xf32>
    %3 = tpu.matmul %0, %1, %cst {dimension_numbers = #tpu.dot_dimension_numbers<[1], [0], [0], [1], [0, 0, 1, 1], [], []>} : vector<32x128xf32>, vector<128x128xf32>, vector<32x128xf32> -> vector<32x128xf32>
    %4 = vector.broadcast %2 : vector<1x128xf32> to vector<32x128xf32>
    %5 = arith.addf %3, %4 : vector<32x128xf32>
    %cst_5 = arith.constant 0.000000e+00 : f32
    %6 = vector.broadcast %cst_5 : f32 to vector<32x128xf32>
    %7 = arith.maximumf %5, %6 : vector<32x128xf32>
    %c0_6 = arith.constant 0 : index
    %c0_7 = arith.constant 0 : index
    %8 = vector.load %arg4[%c0_6, %c0_7] : memref<32x128xf32, #tpu.memory_space<vmem>>, vector<32x128xf32>
    tpu.vector_store %arg4[%c0_6, %c0_7], %7 {strides = array<i32>} : memref<32x128xf32, #tpu.memory_space<vmem>>, vector<32x128xf32>,
    return
  }
  func.func @transform_0(%arg0: i32) -> (i32, i32) {
    %c0_i32 = arith.constant 0 : i32
    %c0_i32_0 = arith.constant 0 : i32
    return %arg0, %c0_i32 : i32, i32
  }
  func.func @transform_1(%arg0: i32) -> (i32, i32) {
    %c0_i32 = arith.constant 0 : i32
    %c0_i32_0 = arith.constant 0 : i32
    %c0_i32_1 = arith.constant 0 : i32
    return %c0_i32, %c0_i32_0 : i32, i32
  }
  func.func @transform_2(%arg0: i32) -> (i32, i32) {
    %c0_i32 = arith.constant 0 : i32
    %c0_i32_0 = arith.constant 0 : i32
    %c0_i32_1 = arith.constant 0 : i32
    return %c0_i32, %c0_i32_0 : i32, i32
  }
  func.func @transform_3(%arg0: i32) -> (i32, i32) {
    %c0_i32 = arith.constant 0 : i32
    %c0_i32_0 = arith.constant 0 : i32
    return %arg0, %c0_i32 : i32, i32
  }
}

</mosaic_0001>

<llo_original>
// kernel: tpu_custom_call.1
$region0: #{tpu_custom_call.1}
  #allocation0 [shape = 'u32[]', space=smem, size = 0x4, offset = 0x4, fixed_abs, tag = 'smem constant byte address 0x4 - core index']
  #allocation1 [shape = 'u32[144,128]{1,0:T(1,128)}', space=vmem, size = 0x12000, scoped, tag = 'internal scratch']
  %s0 = inlined_call_operand.hbm [shape: f32[32,128], index: 0, kind: input, shape index: {}]
  %s1 = inlined_call_operand.hbm [shape: f32[128,128], index: 1, kind: input, shape index: {}]
  %s2 = inlined_call_operand.vmem [shape: f32[1,128], index: 2, kind: input, shape index: {}]
  %s3 = inlined_call_operand.hbm [shape: f32[32,128], index: 3, kind: output, shape index: {}]
  %s4 = sld [smem:[#allocation0]]
  $region30: #{tpu_custom_call.1} parent=0
    _
  %s6 = ssub.s32 1, %s4
  %s7 = scalar_select 0, %s6, %s4
  $region1: #{tpu_custom_call.1} parent=0
    #allocation2 [shape = 'u8[16384]{0}', space=vmem, size = 0x4000, scoped, tag = 'input window, operand 0, single buffered']
    #allocation3 [shape = 's32[1]{0}', space=sflag, size = 0x4, scoped, tag = 'scoped memory for tpu_custom_call.1']
    #allocation4 [shape = 's32[1]{0}', space=sflag, size = 0x4, scoped, tag = 'scoped memory for tpu_custom_call.1']
    #allocation5 [shape = 'u8[65536]{0}', space=vmem, size = 0x10000, scoped, tag = 'input window, operand 1, single buffered']
    #allocation6 [shape = 's32[1]{0}', space=sflag, size = 0x4, scoped, tag = 'scoped memory for tpu_custom_call.1']
    #allocation7 [shape = 'u8[16384]{0}', space=vmem, size = 0x4000, scoped, tag = 'output window, operand 0, single buffered']
    %8 = vsyncpa [#allocation3], 0
    %9 = vsyncpa [#allocation6], 0
    %10 = vsyncpa [#allocation4], 0
    // Predicated region
    $region2: #{tpu_custom_call.1} parent=1 // pred_check
      _
    $region3: #{tpu_custom_call.1} parent=1 // pred_check_branch
      %12 = sbr.rel (0) target = $region5
    $region4: #{tpu_custom_call.1} parent=1 // pred_region
      %s14 = ssub.s32 512, 512
      %15 = vsyncadd [#allocation3], %s14
      %s16 = sshll.u32 [#allocation2], 4
      %s17 = int_to_ptr.vmem [resolvable:$true] %s16
      %22 = dma.hbm_to_vmem [thread:$0]  %s0, 512, %s17, [#allocation3], 128, 128, 8
    $region5: #{tpu_custom_call.1} parent=1 // pred_fallthru
      _
    // Predicated region
    $region6: #{tpu_custom_call.1} parent=1 // pred_check
      _
    $region7: #{tpu_custom_call.1} parent=1 // pred_check_branch
      %24 = sbr.rel (0) target = $region9
    $region8: #{tpu_custom_call.1} parent=1 // pred_region
      %s26 = ssub.s32 2048, 2048
      %27 = vsyncadd [#allocation6], %s26
      %s28 = sshll.u32 [#allocation5], 4
      %s29 = int_to_ptr.vmem [resolvable:$true] %s28
      %34 = dma.hbm_to_vmem [thread:$0]  %s1, 2048, %s29, [#allocation6], 128, 128, 8
    $region9: #{tpu_custom_call.1} parent=1 // pred_fallthru
      _
    // Predicated region
    $region10: #{tpu_custom_call.1} parent=1 // pred_check
      _
    $region11: #{tpu_custom_call.1} parent=1 // pred_check_branch
      %36 = sbr.rel (0) target = $region13
    $region12: #{tpu_custom_call.1} parent=1 // pred_region
      _
    $region13: #{tpu_custom_call.1} parent=1 // pred_fallthru
      _
    // Predicated region
    $region14: #{tpu_custom_call.1} parent=1 // pred_check
      _
    $region15: #{tpu_custom_call.1} parent=1 // pred_check_branch
      %38 = sbr.rel (0) target = $region17
    $region16: #{tpu_custom_call.1} parent=1 // pred_region
      %39 = dma.done [#allocation3], 512
    $region17: #{tpu_custom_call.1} parent=1 // pred_fallthru
      _
    // Predicated region
    $region18: #{tpu_custom_call.1} parent=1 // pred_check
      _
    $region19: #{tpu_custom_call.1} parent=1 // pred_check_branch
      %41 = sbr.rel (0) target = $region21
    $region20: #{tpu_custom_call.1} parent=1 // pred_region
      %42 = dma.done [#allocation6], 2048
    $region21: #{tpu_custom_call.1} parent=1 // pred_fallthru
      _
    %v43 = vld [vmem:[#allocation2] sm:$0xff]
    %v44 = vld [vmem:[#allocation2 + $0x8] sm:$0xff]
    %v45 = vld [vmem:[#allocation2 + $0x10] sm:$0xff]
    %v46 = vld [vmem:[#allocation2 + $0x18] sm:$0xff]
    %v47 = vld [vmem:[#allocation5] sm:$0xff]
    %v48 = vld [vmem:[#allocation5 + $0x8] sm:$0xff]
    %v49 = vld [vmem:[#allocation5 + $0x10] sm:$0xff]
    %v50 = vld [vmem:[#allocation5 + $0x18] sm:$0xff]
    %v51 = vld [vmem:[#allocation5 + $0x20] sm:$0xff]
    %v52 = vld [vmem:[#allocation5 + $0x28] sm:$0xff]
    %v53 = vld [vmem:[#allocation5 + $0x30] sm:$0xff]
    %v54 = vld [vmem:[#allocation5 + $0x38] sm:$0xff]
    %v55 = vld [vmem:[#allocation5 + $0x40] sm:$0xff]
    %v56 = vld [vmem:[#allocation5 + $0x48] sm:$0xff]
    %v57 = vld [vmem:[#allocation5 + $0x50] sm:$0xff]
    %v58 = vld [vmem:[#allocation5 + $0x58] sm:$0xff]
    %v59 = vld [vmem:[#allocation5 + $0x60] sm:$0xff]
    %v60 = vld [vmem:[#allocation5 + $0x68] sm:$0xff]
    %v61 = vld [vmem:[#allocation5 + $0x70] sm:$0xff]
    %v62 = vld [vmem:[#allocation5 + $0x78] sm:$0xff]
    %v63 = vld [vmem:[%s2] sm:$0x1]
    %v65 = vlaneseq
    %v66 = vshrl.u32 %v65, 7
    %v67 = vsub.s32 0, %v66
    %v68 = vrot.slane %v63, %v67
    %70 = vmatprep.subr.mxu0 0.0
    %71 = vmatpush1.msra.mxu0 %v47
    %72 = vmatprep.subr.mxu0 0.0
    %73 = vmatpush1.msra.mxu0 %v48
    %74 = vmatprep.subr.mxu0 0.0
    %75 = vmatpush1.msra.mxu0 %v49
    %76 = vmatprep.subr.mxu0 0.0
    %77 = vmatpush1.msra.mxu0 %v50
    %78 = vmatprep.subr.mxu0 0.0
    %79 = vmatpush1.msra.mxu0 %v51
    %80 = vmatprep.subr.mxu0 0.0
    %81 = vmatpush1.msra.mxu0 %v52
    %82 = vmatprep.subr.mxu0 0.0
    %83 = vmatpush1.msra.mxu0 %v53
    %84 = vmatprep.subr.mxu0 0.0
    %85 = vmatpush1.msra.mxu0 %v54
    %86 = vmatprep.subr.mxu0 0.0
    %87 = vmatpush1.msra.mxu0 %v55
    %88 = vmatprep.subr.mxu0 0.0
    %89 = vmatpush1.msra.mxu0 %v56
    %90 = vmatprep.subr.mxu0 0.0
    %91 = vmatpush1.msra.mxu0 %v57
    %92 = vmatprep.subr.mxu0 0.0
    %93 = vmatpush1.msra.mxu0 %v58
    %94 = vmatprep.subr.mxu0 0.0
    %95 = vmatpush1.msra.mxu0 %v59
    %96 = vmatprep.subr.mxu0 0.0
    %97 = vmatpush1.msra.mxu0 %v60
    %98 = vmatprep.subr.mxu0 0.0
    %99 = vmatpush1.msra.mxu0 %v61
    %100 = vmatprep.subr.mxu0 0.0
    %101 = vmatpush1.msra.mxu0 %v62
    %102 = vmatprep.subr.mxu0 0.0
    %103 = vmatpush1.msra.mxu0 0.0
    %104 = vmatprep.subr.mxu0 0.0
    %105 = vmatpush1.msra.mxu0 0.0
    %106 = vmatprep.subr.mxu0 0.0
    %107 = vmatpush1.msra.mxu0 0.0
    %108 = vmatprep.subr.mxu0 0.0
    %109 = vmatpush1.msra.mxu0 0.0
    %110 = vmatprep.subr.mxu0 0.0
    %111 = vmatpush1.msra.mxu0 0.0
    %112 = vmatprep.subr.mxu0 0.0
    %113 = vmatpush1.msra.mxu0 0.0
    %114 = vmatprep.subr.mxu0 0.0
    %115 = vmatpush1.msra.mxu0 0.0
    %116 = vmatprep.subr.mxu0 0.0
    %117 = vmatpush1.msra.mxu0 0.0
    %118 = vmatprep.subr.mxu0 0.0
    %119 = vmatpush1.msra.mxu0 0.0
    %120 = vmatprep.subr.mxu0 0.0
    %121 = vmatpush1.msra.mxu0 0.0
    %122 = vmatprep.subr.mxu0 0.0
    %123 = vmatpush1.msra.mxu0 0.0
    %124 = vmatprep.subr.mxu0 0.0
    %125 = vmatpush1.msra.mxu0 0.0
    %126 = vmatprep.subr.mxu0 0.0
    %127 = vmatpush1.msra.mxu0 0.0
    %128 = vmatprep.subr.mxu0 0.0
    %129 = vmatpush1.msra.mxu0 0.0
    %130 = vmatprep.subr.mxu0 0.0
    %131 = vmatpush1.msra.mxu0 0.0
    %132 = vmatprep.subr.mxu0 0.0
    %133 = vmatpush1.msra.mxu0 0.0
    %134 = vmatprep.mubr.f32.mxu0 0.0
    %135 = vmatmul.mubr.f32.gmra.mrb[0].mxu0 %v43
    %v136 = vpop.f32.mrb[0].mxu0
    %v137 = vadd.f32 %v68, %v136
    %v138 = vpop.f32.mrb[0].mxu0
    %139 = vmatprep.mubr.f32.mxu0 0.0
    %140 = vmatmul.mubr.f32.gmra.mrb[0].mxu0 %v44
    %v141 = vpop.f32.mrb[0].mxu0
    %v142 = vadd.f32 %v68, %v141
    %v143 = vpop.f32.mrb[0].mxu0
    %144 = vmatprep.mubr.f32.mxu0 0.0
    %145 = vmatmul.mubr.f32.gmra.mrb[0].mxu0 %v45
    %v146 = vpop.f32.mrb[0].mxu0
    %v147 = vadd.f32 %v68, %v146
    %v148 = vpop.f32.mrb[0].mxu0
    %149 = vmatprep.mubr.f32.mxu0 0.0
    %150 = vmatmul.mubr.f32.gmra.mrb[0].mxu0 %v46
    %v151 = vpop.f32.mrb[0].mxu0
    %v152 = vadd.f32 %v68, %v151
    %v153 = vpop.f32.mrb[0].mxu0
    %154 = vdwg.mxu0
    %v155 = vmax.f32 %v137, 0.0
    %v156 = vmax.f32 %v142, 0.0
    %v157 = vmax.f32 %v147, 0.0
    %v158 = vmax.f32 %v152, 0.0
    %159 = vst [vmem:[#allocation7] sm:$0xff] %v155
    %160 = vst [vmem:[#allocation7 + $0x8] sm:$0xff] %v156
    %161 = vst [vmem:[#allocation7 + $0x10] sm:$0xff] %v157
    %162 = vst [vmem:[#allocation7 + $0x18] sm:$0xff] %v158
    // Predicated region
    $region22: #{tpu_custom_call.1} parent=1 // pred_check
      _
    $region23: #{tpu_custom_call.1} parent=1 // pred_check_branch
      %164 = sbr.rel (0) target = $region25
    $region24: #{tpu_custom_call.1} parent=1 // pred_region
      %s166 = ssub.s32 512, 512
      %167 = vsyncadd [#allocation4], %s166
      %s168 = sshll.u32 [#allocation7], 4
      %s169 = int_to_ptr.vmem [resolvable:$true] %s168
      %174 = dma.vmem_to_hbm [thread:$0]  %s169, 512, %s3, [#allocation4], 128, 128, 8
    $region25: #{tpu_custom_call.1} parent=1 // pred_fallthru
      _
    // Predicated region
    $region26: #{tpu_custom_call.1} parent=1 // pred_check
      _
    $region27: #{tpu_custom_call.1} parent=1 // pred_check_branch
      %176 = sbr.rel (0) target = $region29
    $region28: #{tpu_custom_call.1} parent=1 // pred_region
      %177 = dma.done [#allocation4], 512
    $region29: #{tpu_custom_call.1} parent=1 // pred_fallthru
      _
    %178 = vsyncpa [#allocation3], 1
    %179 = vsyncpa [#allocation6], 1
    %180 = vsyncpa [#allocation4], 1

</llo_original>
